<compile_context>
chip_gen: v6e
topology: v6e:2x2x1
jax: 0.10.0
libtpu: 0.0.40
codegen_flags: <defaults>
</compile_context>

<pallas_src>
import numpy as np
import jax
import jax.numpy as jnp
from jax.experimental import pallas as pl
from jax.experimental.pallas import tpu as pltpu


LN_EPS = 1e-5


# ---------------------------------------------------------------------------
# Pallas kernels
# ---------------------------------------------------------------------------
def _patch_embed_norm_kernel(p_ref, w_ref, prm_ref, o_ref):
    """Row tile: patches @ W + b, then LayerNorm over embed_dim (f32 math)."""
    y = jnp.dot(p_ref[...], w_ref[...],
                preferred_element_type=jnp.float32)            # (Tr, E) f32 acc
    bias = prm_ref[0:1, :]                                     # (1, E)
    gamma = prm_ref[1:2, :]
    beta = prm_ref[2:3, :]
    y = y + bias
    mu = jnp.mean(y, axis=-1, keepdims=True)
    # One-pass biased variance (f32 accumulation makes E[y^2]-mu^2 safe here).
    var = jnp.maximum(jnp.mean(y * y, axis=-1, keepdims=True) - mu * mu, 0.0)
    out = (y - mu) * jax.lax.rsqrt(var + LN_EPS) * gamma + beta
    o_ref[...] = out.astype(o_ref.dtype)                       # bf16 store


def _patch_embed_kernel(p_ref, w_ref, prm_ref, o_ref):
    """Row tile: patches @ W + b (norm_layer=None path)."""
    y = jnp.dot(p_ref[...], w_ref[...],
                preferred_element_type=jnp.float32)
    o_ref[...] = (y + prm_ref[0:1, :]).astype(o_ref.dtype)


# ---------------------------------------------------------------------------
# Wrapper
# ---------------------------------------------------------------------------
def _choose_row_tile(rows):
    """Largest tile giving >=2 grid steps (v7x dual-core) and <=25% zero-padding."""
    for t in (2048, 1024, 512, 256, 128, 64, 32, 16, 8):
        steps = pl.cdiv(rows, t)
        if steps >= 2 and steps * t - rows <= rows // 4:
            return t
    return 8


def patch_embed_forward(x, w_conv, b_conv, gamma=None, beta=None, *,
                        patch_size=4, matmul_dtype=jnp.bfloat16,
                        out_dtype=jnp.bfloat16):
    """x: (B, C, H, W); w_conv: (E, C, p, p); b_conv: (E,); gamma/beta: (E,) or None.
       Returns (B, Hp*Wp, E) in out_dtype (default bf16)."""
    B, C, H, W = x.shape
    p = patch_size
    assert H % p == 0 and W % p == 0, "image size must be divisible by patch size"
    Hp, Wp = H // p, W // p
    E = w_conv.shape[0]
    K = C * p * p
    rows = B * Hp * Wp

    # im2col / space-to-depth: (B,C,H,W) -> (rows, K), column order (c, kh, kw)
    # to match PyTorch Conv2d weight.reshape(E, -1).  Pure layout plumbing: the
    # transpose + bf16 cast + pad form one XLA fusion, eligible (via
    # allow_input_fusion below) to fuse into the Pallas input DMA.
    patches = x.reshape(B, C, Hp, p, Wp, p)
    patches = jnp.transpose(patches, (0, 2, 4, 1, 3, 5)).reshape(rows, K)
    patches = patches.astype(matmul_dtype)

    Tr = _choose_row_tile(rows)
    n_steps = pl.cdiv(rows, Tr)
    padded_rows = n_steps * Tr
    if padded_rows != rows:
        patches = jnp.pad(patches, ((0, padded_rows - rows), (0, 0)))

    # Conv weight (E, C, p, p) -> matmul weight (K, E), bf16 (MXU-native).
    w_mat = jnp.transpose(w_conv.reshape(E, K), (1, 0)).astype(matmul_dtype)

    if gamma is not None:
        assert beta is not None
        prm = jnp.stack([b_conv, gamma, beta], axis=0).astype(jnp.float32)  # (3, E)
        kernel = _patch_embed_norm_kernel
        n_trans = padded_rows                                   # one rsqrt per row
    else:
        prm = b_conv.reshape(1, E).astype(jnp.float32)          # (1, E)
        kernel = _patch_embed_kernel
        n_trans = 0

    in_bytes = jnp.dtype(matmul_dtype).itemsize
    out_bytes = jnp.dtype(out_dtype).itemsize
    cost = pl.CostEstimate(
        flops=2 * padded_rows * K * E,
        transcendentals=n_trans,
        bytes_accessed=(padded_rows * (K * in_bytes + E * out_bytes)
                        + K * E * in_bytes + prm.size * 4))

    out = pl.pallas_call(
        kernel,
        out_shape=jax.ShapeDtypeStruct((padded_rows, E), out_dtype),
        grid=(n_steps,),
        in_specs=[pl.BlockSpec((Tr, K), lambda i: (i, 0)),      # row tile
                  pl.BlockSpec((K, E), lambda i: (0, 0)),       # resident weight
                  pl.BlockSpec(prm.shape, lambda i: (0, 0))],   # fused b/gamma/beta
        out_specs=pl.BlockSpec((Tr, E), lambda i: (i, 0)),
        compiler_params=pltpu.CompilerParams(
            dimension_semantics=("parallel",),
            allow_input_fusion=[True, False, False]),
        cost_estimate=cost,
    )(patches, w_mat, prm)

    return out[:rows].reshape(B, Hp * Wp, E)


# ---------------------------------------------------------------------------
# Pure-JAX reference (real strided conv) for correctness checks
# ---------------------------------------------------------------------------
def patch_embed_reference(x, w_conv, b_conv, gamma=None, beta=None, *,
                          patch_size=4, matmul_dtype=jnp.bfloat16):
    p = patch_size
    y = jax.lax.conv_general_dilated(
        x.astype(matmul_dtype), w_conv.astype(matmul_dtype),
        window_strides=(p, p), padding="VALID",
        dimension_numbers=("NCHW", "OIHW", "NCHW"),
        preferred_element_type=jnp.float32)                      # (B, E, Hp, Wp)
    B, E, Hp, Wp = y.shape
    y = y + b_conv.reshape(1, E, 1, 1).astype(jnp.float32)
    y = y.reshape(B, E, Hp * Wp).transpose(0, 2, 1)              # (B, L, E)
    if gamma is not None:
        mu = jnp.mean(y, axis=-1, keepdims=True)
        var = jnp.mean((y - mu) ** 2, axis=-1, keepdims=True)
        y = (y - mu) * jax.lax.rsqrt(var + LN_EPS) * gamma + beta
    return y


def _check(out, ref, tol=3e-2):
    out_f32 = np.asarray(out.astype(jnp.float32))
    np.testing.assert_allclose(out_f32, np.asarray(ref), rtol=tol, atol=tol)


# ---------------------------------------------------------------------------
if __name__ == "__main__":
    # Small config consistent with the module: patch_size=4, in_chans=3,
    # embed_dim=96, norm_layer=nn.LayerNorm, batch=2, img 32x32.
    B, Cin, H, W = 2, 3, 32, 32
    p, E = 4, 96

    key = jax.random.PRNGKey(0)
    k1, k2, k3, k4, k5 = jax.random.split(key, 5)
    x = jax.random.normal(k1, (B, Cin, H, W), dtype=jnp.float32)
    w_conv = 0.1 * jax.random.normal(k2, (E, Cin, p, p), dtype=jnp.float32)
    b_conv = 0.1 * jax.random.normal(k3, (E,), dtype=jnp.float32)
    gamma = 1.0 + 0.05 * jax.random.normal(k4, (E,), dtype=jnp.float32)
    beta = 0.05 * jax.random.normal(k5, (E,), dtype=jnp.float32)

    # 1) norm_layer=LayerNorm path (bf16 output).
    out = jax.block_until_ready(
        patch_embed_forward(x, w_conv, b_conv, gamma, beta, patch_size=p))
    ref = jax.block_until_ready(
        patch_embed_reference(x, w_conv, b_conv, gamma, beta, patch_size=p))
    assert out.shape == (B, (H // p) * (W // p), E)
    _check(out, ref)

    # 2) norm_layer=None path.
    out2 = jax.block_until_ready(
        patch_embed_forward(x, w_conv, b_conv, None, None, patch_size=p))
    ref2 = jax.block_until_ready(
        patch_embed_reference(x, w_conv, b_conv, None, None, patch_size=p))
    _check(out2, ref2)

    # 3) Row count not a multiple of the tile -> exercises the zero-pad + slice path.
    x3 = jax.random.normal(jax.random.PRNGKey(1), (1, Cin, 28, 28), dtype=jnp.float32)
    out3 = jax.block_until_ready(
        patch_embed_forward(x3, w_conv, b_conv, gamma, beta, patch_size=p))
    ref3 = jax.block_until_ready(
        patch_embed_reference(x3, w_conv, b_conv, gamma, beta, patch_size=p))
    assert out3.shape == (1, 7 * 7, E)
    _check(out3, ref3)

    print("KERNEL_OK")
</pallas_src>

<mosaic_0001>
module attributes {stable_mosaic.version = 11 : i64} {
  func.func @_patch_embed_norm_kernel(%arg0: i32, %arg1: memref<64x48xbf16, #tpu.memory_space<vmem>>, %arg2: memref<48x96xbf16, #tpu.memory_space<vmem>>, %arg3: memref<3x96xf32, #tpu.memory_space<vmem>>, %arg4: memref<64x96xbf16, #tpu.memory_space<vmem>>) attributes {dimension_semantics = [#tpu.dimension_semantics<parallel>], iteration_bounds = array<i64: 2>, scalar_prefetch = 0 : i64, scratch_operands = 0 : i64, tpu.core_type = #tpu.core_type<tc>, window_params = [{transform_indices = @transform_0, window_bounds = array<i64: 64, 48>}, {pipeline_mode = #tpu.pipeline_mode<synchronous>, transform_indices = @transform_1, window_bounds = array<i64: 48, 96>}, {pipeline_mode = #tpu.pipeline_mode<synchronous>, transform_indices = @transform_2, window_bounds = array<i64: 3, 96>}, {transform_indices = @transform_3, window_bounds = array<i64: 64, 96>}]} {
    %c0 = arith.constant 0 : index
    %c0_0 = arith.constant 0 : index
    %0 = vector.load %arg1[%c0, %c0_0] : memref<64x48xbf16, #tpu.memory_space<vmem>>, vector<64x48xbf16>
    %c0_1 = arith.constant 0 : index
    %c0_2 = arith.constant 0 : index
    %1 = vector.load %arg2[%c0_1, %c0_2] : memref<48x96xbf16, #tpu.memory_space<vmem>>, vector<48x96xbf16>
    %cst = arith.constant dense<0.000000e+00> : vector<64x96xf32>
    %2 = tpu.matmul %0, %1, %cst {dimension_numbers = #tpu.dot_dimension_numbers<[1], [0], [0], [1], [0, 0, 1, 1], [], []>} : vector<64x48xbf16>, vector<48x96xbf16>, vector<64x96xf32> -> vector<64x96xf32>
    %c0_3 = arith.constant 0 : index
    %c0_4 = arith.constant 0 : index
    %3 = vector.load %arg3[%c0_3, %c0_4] : memref<3x96xf32, #tpu.memory_space<vmem>>, vector<1x96xf32>
    %c1 = arith.constant 1 : index
    %c0_5 = arith.constant 0 : index
    %4 = vector.load %arg3[%c1, %c0_5] : memref<3x96xf32, #tpu.memory_space<vmem>>, vector<1x96xf32>
    %c2 = arith.constant 2 : index
    %c0_6 = arith.constant 0 : index
    %5 = vector.load %arg3[%c2, %c0_6] : memref<3x96xf32, #tpu.memory_space<vmem>>, vector<1x96xf32>
    %6 = vector.broadcast %3 : vector<1x96xf32> to vector<64x96xf32>
    %7 = arith.addf %2, %6 : vector<64x96xf32>
    %cst_7 = arith.constant dense<0.000000e+00> : vector<64xf32>
    %8 = vector.multi_reduction <add>, %7, %cst_7 [1] : vector<64x96xf32> to vector<64xf32>
    %9 = vector.shape_cast %8 : vector<64xf32> to vector<64x1xf32>
    %cst_8 = arith.constant 9.600000e+01 : f32
    %10 = vector.broadcast %cst_8 : f32 to vector<64x1xf32>
    %11 = arith.divf %9, %10 : vector<64x1xf32>
    %12 = arith.mulf %7, %7 : vector<64x96xf32>
    %cst_9 = arith.constant dense<0.000000e+00> : vector<64xf32>
    %13 = vector.multi_reduction <add>, %12, %cst_9 [1] : vector<64x96xf32> to vector<64xf32>
    %14 = vector.shape_cast %13 : vector<64xf32> to vector<64x1xf32>
    %cst_10 = arith.constant 9.600000e+01 : f32
    %15 = vector.broadcast %cst_10 : f32 to vector<64x1xf32>
    %16 = arith.divf %14, %15 : vector<64x1xf32>
    %17 = arith.mulf %11, %11 : vector<64x1xf32>
    %18 = arith.subf %16, %17 : vector<64x1xf32>
    %cst_11 = arith.constant 0.000000e+00 : f32
    %19 = vector.broadcast %cst_11 : f32 to vector<64x1xf32>
    %20 = arith.maximumf %18, %19 : vector<64x1xf32>
    %21 = vector.broadcast %11 : vector<64x1xf32> to vector<64x96xf32>
    %22 = arith.subf %7, %21 : vector<64x96xf32>
    %cst_12 = arith.constant 9.99999974E-6 : f32
    %23 = vector.broadcast %cst_12 : f32 to vector<64x1xf32>
    %24 = arith.addf %20, %23 : vector<64x1xf32>
    %25 = math.rsqrt %24 : vector<64x1xf32>
    %26 = vector.broadcast %25 : vector<64x1xf32> to vector<64x96xf32>
    %27 = arith.mulf %22, %26 : vector<64x96xf32>
    %28 = vector.broadcast %4 : vector<1x96xf32> to vector<64x96xf32>
    %29 = arith.mulf %27, %28 : vector<64x96xf32>
    %30 = vector.broadcast %5 : vector<1x96xf32> to vector<64x96xf32>
    %31 = arith.addf %29, %30 : vector<64x96xf32>
    %32 = arith.truncf %31 : vector<64x96xf32> to vector<64x96xbf16>
    %c0_13 = arith.constant 0 : index
    %c0_14 = arith.constant 0 : index
    %33 = vector.load %arg4[%c0_13, %c0_14] : memref<64x96xbf16, #tpu.memory_space<vmem>>, vector<64x96xbf16>
    tpu.vector_store %arg4[%c0_13, %c0_14], %32 {strides = array<i32>} : memref<64x96xbf16, #tpu.memory_space<vmem>>, vector<64x96xbf16>,
    return
  }
  func.func @transform_0(%arg0: i32) -> (i32, i32) {
    %c0_i32 = arith.constant 0 : i32
    %c0_i32_0 = arith.constant 0 : i32
    return %arg0, %c0_i32 : i32, i32
  }
  func.func @transform_1(%arg0: i32) -> (i32, i32) {
    %c0_i32 = arith.constant 0 : i32
    %c0_i32_0 = arith.constant 0 : i32
    %c0_i32_1 = arith.constant 0 : i32
    return %c0_i32, %c0_i32_0 : i32, i32
  }
  func.func @transform_2(%arg0: i32) -> (i32, i32) {
    %c0_i32 = arith.constant 0 : i32
    %c0_i32_0 = arith.constant 0 : i32
    %c0_i32_1 = arith.constant 0 : i32
    return %c0_i32, %c0_i32_0 : i32, i32
  }
  func.func @transform_3(%arg0: i32) -> (i32, i32) {
    %c0_i32 = arith.constant 0 : i32
    %c0_i32_0 = arith.constant 0 : i32
    return %arg0, %c0_i32 : i32, i32
  }
}

</mosaic_0001>

<llo_original>
// kernel: tpu_custom_call.1
$region0: #{tpu_custom_call.1}
  #allocation0 [shape = 'u32[]', space=smem, size = 0x4, offset = 0x4, fixed_abs, tag = 'smem constant byte address 0x4 - core index']
  #allocation1 [shape = 'u32[144,128]{1,0:T(1,128)}', space=vmem, size = 0x12000, scoped, tag = 'internal scratch']
  %s0 = inlined_call_operand.vmem [shape: bf16[128,48], index: 0, kind: input, shape index: {}]
  %s1 = inlined_call_operand.vmem [shape: bf16[48,96], index: 1, kind: input, shape index: {}]
  %s2 = inlined_call_operand.vmem [shape: f32[3,96], index: 2, kind: input, shape index: {}]
  %s3 = inlined_call_operand.vmem [shape: bf16[128,96], index: 3, kind: output, shape index: {}]
  %s4 = sld [smem:[#allocation0]]
  $region45: #{tpu_custom_call.1} parent=0
    _
  %s6 = ssub.s32 1, %s4
  %s7 = scalar_select 0, %s6, %s4
  loop: start=0, step=1, limit=4
  $region2: #{tpu_custom_call.1} parent=0 // loop_pre_header
    _
  $region3: #{tpu_custom_call.1} parent=0 // loop_header
    %s9 = sphi 0, %s13
    %p10 = scmp.ge.s32.totalorder %s9, 4
    %s19 = sphi 0, %s21
    %s22 = sphi 0, %s19
    %s23 = sphi 0, %s22
    %s39 = sphi 0, %s23
    %s43 = sphi 0, %s43
    %s45 = sphi 0, %s43
    %s46 = sphi 0, %s45
    %s60 = sphi 0, %s46
    %s64 = sphi 0, %s64
    %s66 = sphi 0, %s64
    %s67 = sphi 0, %s66
    %s81 = sphi 0, %s67
    %s87 = sphi 0, %s89
    %s90 = sphi 0, %s87
    %s91 = sphi 0, %s90
    %s107 = sphi 0, %s91
  $region4: #{tpu_custom_call.1} parent=0 // loop_header_branch
    %12 = sbr.rel (%p10) target = $region8
  $region5: #{tpu_custom_call.1} parent=0 // loop_body
    %s14 = ssub.s32 %s9, 1
    %s15 = ssub.s32 %s9, 2
    %s16 = sadd.s32 %s9, 1
    %s17 = ssub.s32 %s9, %s16
    %p18 = scmp.eq.s32.totalorder %s17, 0
    %s20 = sadd.s32 %s19, 1
    %s21 = scalar_select %p18, %s19, %s20
    %p24 = pneg %p18
    %p25 = scmp.eq.s32.totalorder %s9, 1
    %p26 = por %p24, %p25
    %p27 = scmp.ne.s32.totalorder %s19, %s22
    %p28 = scmp.eq.s32.totalorder %s9, 0
    %p29 = por %p27, %p28
    %p30 = scmp.ne.s32.totalorder %s19, %s22
    %p31 = scmp.eq.s32.totalorder %s14, 1
    %p32 = por %p30, %p31
    %p33 = scmp.ne.s32.totalorder %s22, %s23
    %p34 = scmp.eq.s32.totalorder %s14, 0
    %p35 = por %p33, %p34
    %p36 = scmp.ne.s32.totalorder %s22, %s23
    %p37 = scmp.eq.s32.totalorder %s15, 1
    %p38 = por %p36, %p37
    %p40 = scmp.ne.s32.totalorder %s23, %s39
    %p41 = scmp.eq.s32.totalorder %s15, 0
    %p42 = por %p40, %p41
    %s44 = sadd.s32 %s43, 1
    %p47 = scmp.eq.s32.totalorder %s9, 1
    %p48 = scmp.ne.s32.totalorder %s43, %s45
    %p49 = scmp.eq.s32.totalorder %s9, 0
    %p50 = por %p48, %p49
    %p51 = scmp.ne.s32.totalorder %s43, %s45
    %p52 = scmp.eq.s32.totalorder %s14, 1
    %p53 = por %p51, %p52
    %p54 = scmp.ne.s32.totalorder %s45, %s46
    %p55 = scmp.eq.s32.totalorder %s14, 0
    %p56 = por %p54, %p55
    %p57 = scmp.ne.s32.totalorder %s45, %s46
    %p58 = scmp.eq.s32.totalorder %s15, 1
    %p59 = por %p57, %p58
    %p61 = scmp.ne.s32.totalorder %s46, %s60
    %p62 = scmp.eq.s32.totalorder %s15, 0
    %p63 = por %p61, %p62
    %s65 = sadd.s32 %s64, 1
    %p68 = scmp.eq.s32.totalorder %s9, 1
    %p69 = scmp.ne.s32.totalorder %s64, %s66
    %p70 = scmp.eq.s32.totalorder %s9, 0
    %p71 = por %p69, %p70
    %p72 = scmp.ne.s32.totalorder %s64, %s66
    %p73 = scmp.eq.s32.totalorder %s14, 1
    %p74 = por %p72, %p73
    %p75 = scmp.ne.s32.totalorder %s66, %s67
    %p76 = scmp.eq.s32.totalorder %s14, 0
    %p77 = por %p75, %p76
    %p78 = scmp.ne.s32.totalorder %s66, %s67
    %p79 = scmp.eq.s32.totalorder %s15, 1
    %p80 = por %p78, %p79
    %p82 = scmp.ne.s32.totalorder %s67, %s81
    %p83 = scmp.eq.s32.totalorder %s15, 0
    %p84 = por %p82, %p83
    %s85 = ssub.s32 %s9, %s16
    %p86 = scmp.eq.s32.totalorder %s85, 0
    %s88 = sadd.s32 %s87, 1
    %s89 = scalar_select %p86, %s87, %s88
    %p92 = pneg %p86
    %p93 = scmp.eq.s32.totalorder %s9, 1
    %p94 = por %p92, %p93
    %p95 = scmp.ne.s32.totalorder %s87, %s90
    %p96 = scmp.eq.s32.totalorder %s9, 0
    %p97 = por %p95, %p96
    %p98 = scmp.ne.s32.totalorder %s87, %s90
    %p99 = scmp.eq.s32.totalorder %s14, 1
    %p100 = por %p98, %p99
    %p101 = scmp.ne.s32.totalorder %s90, %s91
    %p102 = scmp.eq.s32.totalorder %s14, 0
    %p103 = por %p101, %p102
    %p104 = scmp.ne.s32.totalorder %s90, %s91
    %p105 = scmp.eq.s32.totalorder %s15, 1
    %p106 = por %p104, %p105
    %p108 = scmp.ne.s32.totalorder %s91, %s107
    %p109 = scmp.eq.s32.totalorder %s15, 0
    %p110 = por %p108, %p109
    %p111 = scmp.le.s32.totalorder 1, %s9
    %p112 = scmp.lt.s32.totalorder %s9, 3
    %p113 = pnand %p111, %p112
    %p114 = pneg %p113
    // Predicated region
    $region9: #{tpu_custom_call.1} parent=5 // pred_check
      _
    $region10: #{tpu_custom_call.1} parent=5 // pred_check_branch
      %116 = sbr.rel (%p113) target = $region12
    $region11: #{tpu_custom_call.1} parent=5 // pred_region
      %s117 = ssub.s32 %s9, 1
      // Predicated region
      $region13: #{tpu_custom_call.1} parent=11 // pred_check
        %p118 = pneg %p56
      $region14: #{tpu_custom_call.1} parent=11 // pred_check_branch
        %120 = sbr.rel (%p118) target = $region16
      $region15: #{tpu_custom_call.1} parent=11 // pred_region
        _
      $region16: #{tpu_custom_call.1} parent=11 // pred_fallthru
        _
      // Predicated region
      $region17: #{tpu_custom_call.1} parent=11 // pred_check
        %p121 = pneg %p77
      $region18: #{tpu_custom_call.1} parent=11 // pred_check_branch
        %123 = sbr.rel (%p121) target = $region20
      $region19: #{tpu_custom_call.1} parent=11 // pred_region
        _
      $region20: #{tpu_custom_call.1} parent=11 // pred_fallthru
        _
    $region12: #{tpu_custom_call.1} parent=5 // pred_fallthru
      _
    %p124 = scmp.lt.s32.totalorder %s9, 2
    // Predicated region
    $region21: #{tpu_custom_call.1} parent=5 // pred_check
      %p125 = pneg %p124
    $region22: #{tpu_custom_call.1} parent=5 // pred_check_branch
      %127 = sbr.rel (%p125) target = $region24
    $region23: #{tpu_custom_call.1} parent=5 // pred_region
      // Predicated region
      $region25: #{tpu_custom_call.1} parent=23 // pred_check
        %p128 = pneg %p29
      $region26: #{tpu_custom_call.1} parent=23 // pred_check_branch
        %130 = sbr.rel (%p128) target = $region28
      $region27: #{tpu_custom_call.1} parent=23 // pred_region
        %s131 = smul.u32 8, %s9
        %p132 = scmp.lt.s32.totalorder %s131, 15
        %s133 = scalar_select %p132, %s131, 15
        %s134 = smul.addr %s133, 4
        %s135 = scalar_lea.vmem %s0, %s134
        %s136 = smul.u32 8, %s9
      $region28: #{tpu_custom_call.1} parent=23 // pred_fallthru
        _
    $region24: #{tpu_custom_call.1} parent=5 // pred_fallthru
      _
    %p137 = scmp.le.s32.totalorder 1, %s9
    %p138 = scmp.lt.s32.totalorder %s9, 3
    %p139 = pnand %p137, %p138
    %p140 = pneg %p139
    // Predicated region
    $region29: #{tpu_custom_call.1} parent=5 // pred_check
      _
    $region30: #{tpu_custom_call.1} parent=5 // pred_check_branch
      %142 = sbr.rel (%p139) target = $region32
    $region31: #{tpu_custom_call.1} parent=5 // pred_region
      %s143 = ssub.s32 %s9, 1
      %s144 = smul.u32 8, %s14
      %p145 = scmp.lt.s32.totalorder %s144, 15
      %s146 = scalar_select %p145, %s144, 15
      %s147 = smul.addr %s146, 4
      %s148 = scalar_lea.vmem %s0, %s147
      %p149 = pneg %p35
      %p150 = pneg %p32
      %p151 = pneg %p56
      %p152 = pneg %p53
      %p153 = pneg %p77
      %p154 = pneg %p74
      %p155 = pneg %p103
      %p156 = pneg %p100
      %s157 = smul.u32 8, %s14
      %p158 = scmp.lt.s32.totalorder %s157, 15
      %s159 = scalar_select %p158, %s157, 15
      %s160 = smul.addr %s159, 4
      %s161 = scalar_lea.vmem %s3, %s160
      %s162 = smul.u32 8, %s14
      %p163 = scmp.lt.s32.totalorder %s162, 15
      %s164 = scalar_select %p163, %s162, 15
      %s165 = smul.addr %s164, 4
      %s166 = scalar_lea.vmem %s0, %s165
      %s167 = smul.u32 8, %s14
      %s168 = smul.u32 8, %s14
      %p169 = scmp.lt.s32.totalorder %s168, 15
      %s170 = scalar_select %p169, %s168, 15
      %s171 = smul.addr %s170, 4
      %s172 = scalar_lea.vmem %s3, %s171
      %s173 = smul.u32 8, %s14
      %v175 = vld [vmem:[%s166] sm:$0xf]
      %v176 = vld [vmem:[%s166 + $0x4] sm:$0xf]
      %v177 = vld [vmem:[%s166 + $0x8] sm:$0xf]
      %v178 = vld [vmem:[%s166 + $0xc] sm:$0xf]
      %v179 = vld [vmem:[%s166 + $0x10] sm:$0xf]
      %v180 = vld [vmem:[%s166 + $0x14] sm:$0xf]
      %v181 = vld [vmem:[%s166 + $0x18] sm:$0xf]
      %v182 = vld [vmem:[%s166 + $0x1c] sm:$0xf]
      %v183 = vld [vmem:[%s1] sm:$0xf]
      %v184 = vld [vmem:[%s1 + $0x4] sm:$0xf]
      %v185 = vld [vmem:[%s1 + $0x8] sm:$0xf]
      %v186 = vld [vmem:[%s1 + $0xc] sm:$0xf]
      %v187 = vld [vmem:[%s1 + $0x10] sm:$0xf]
      %v188 = vld [vmem:[%s1 + $0x14] sm:$0xf]
      %v189 = vld [vmem:[%s2] sm:$0x1]
      %v190 = vld [vmem:[%s2 + $0x1] sm:$0x1]
      %v191 = vld [vmem:[%s2 + $0x2] sm:$0x1]
      %v192 = vlaneseq
      %v193 = vshrl.u32 %v192, 7
      %v194 = vsub.s32 0, %v193
      %v195 = vrot.slane %v189, %v194
      %v204 = vunpack.c.l.b16 %v175
      %v205 = vunpack.c.l.b16 %v176
      %v206 = vunpack.c.l.b16 %v177
      %v207 = vunpack.c.l.b16 %v178
      %v208 = vunpack.c.l.b16 %v179
      %v209 = vunpack.c.l.b16 %v180
      %v210 = vunpack.c.l.b16 %v181
      %v211 = vunpack.c.l.b16 %v182
      %v212 = vpack.c.b16 %v205, %v204
      %v213 = vpack.c.b16 %v207, %v206
      %v214 = vpack.c.b16 %v209, %v208
      %v215 = vpack.c.b16 %v211, %v210
      %v222 = vunpack.c.l.b16 %v183
      %v223 = vunpack.c.l.b16 %v184
      %v224 = vunpack.c.l.b16 %v185
      %v225 = vunpack.c.l.b16 %v186
      %v226 = vunpack.c.l.b16 %v187
      %v227 = vunpack.c.l.b16 %v188
      %v228 = vpack.c.b16 %v223, %v222
      %v229 = vpack.c.b16 %v225, %v224
      %v230 = vpack.c.b16 %v227, %v226
      %vm234 = vcmask 392192
      %v236 = vsel %vm234, %v212, 0
      %v239 = vsel %vm234, %v213, 0
      %v242 = vsel %vm234, %v214, 0
      %v245 = vsel %vm234, %v215, 0
      %247 = vmatprep.subr.bf16.mxu0 0
      %248 = vmatpush1.bf16.msra.mxu0 0
      %249 = vmatprep.subr.bf16.mxu0 0
      %250 = vmatpush1.bf16.msra.mxu0 0
      %251 = vmatprep.subr.bf16.mxu0 0
      %252 = vmatpush1.bf16.msra.mxu0 0
      %253 = vmatprep.subr.bf16.mxu0 0
      %254 = vmatpush1.bf16.msra.mxu0 0
      %255 = vmatprep.subr.bf16.mxu0 0
      %256 = vmatpush1.bf16.msra.mxu0 0
      %257 = vmatprep.subr.bf16.mxu0 0
      %258 = vmatpush1.bf16.msra.mxu0 %v230
      %259 = vmatprep.subr.bf16.mxu0 0
      %260 = vmatpush1.bf16.msra.mxu0 %v229
      %261 = vmatprep.subr.bf16.mxu0 0
      %262 = vmatpush1.bf16.msra.mxu0 %v228
      %263 = vmatprep.subr.bf16.mxu0 0
      %264 = vmatpush2.bf16.msra.mxu0 0
      %265 = vmatprep.subr.bf16.mxu0 0
      %266 = vmatpush2.bf16.msra.mxu0 0
      %267 = vmatprep.subr.bf16.mxu0 0
      %268 = vmatpush2.bf16.msra.mxu0 0
      %269 = vmatprep.subr.bf16.mxu0 0
      %270 = vmatpush2.bf16.msra.mxu0 0
      %271 = vmatprep.subr.bf16.mxu0 0
      %272 = vmatpush2.bf16.msra.mxu0 0
      %273 = vmatprep.subr.bf16.mxu0 0
      %274 = vmatpush2.bf16.msra.mxu0 0
      %275 = vmatprep.subr.bf16.mxu0 0
      %276 = vmatpush2.bf16.msra.mxu0 0
      %277 = vmatprep.subr.bf16.mxu0 0
      %278 = vmatpush2.bf16.msra.mxu0 0
      %279 = vmatprep.mubr.bf16.mxu0 0
      %280 = vmatmul.mubr.bf16.gmra.mxu0 %v236
      %v281 = vpop.f32.mrf.mxu0
      %v282 = vadd.f32 %v195, %v281
      %v283 = vpop.f32.mrf.mxu0
      %v284 = vpop.f32.mrf.mxu0
      %v285 = vadd.f32 %v195, %v284
      %v286 = vpop.f32.mrf.mxu0
      %287 = vmatprep.mubr.bf16.mxu0 0
      %288 = vmatmul.mubr.bf16.gmra.mxu0 %v239
      %v289 = vpop.f32.mrf.mxu0
      %v290 = vadd.f32 %v195, %v289
      %v291 = vpop.f32.mrf.mxu0
      %v292 = vpop.f32.mrf.mxu0
      %v293 = vadd.f32 %v195, %v292
      %v294 = vpop.f32.mrf.mxu0
      %295 = vmatprep.mubr.bf16.mxu0 0
      %296 = vmatmul.mubr.bf16.gmra.mxu0 %v242
      %v297 = vpop.f32.mrf.mxu0
      %v298 = vadd.f32 %v195, %v297
      %v299 = vpop.f32.mrf.mxu0
      %v300 = vpop.f32.mrf.mxu0
      %v301 = vadd.f32 %v195, %v300
      %v302 = vpop.f32.mrf.mxu0
      %303 = vmatprep.mubr.bf16.mxu0 0
      %304 = vmatmul.mubr.bf16.gmra.mxu0 %v245
      %v305 = vpop.f32.mrf.mxu0
      %v306 = vadd.f32 %v195, %v305
      %v307 = vpop.f32.mrf.mxu0
      %v308 = vpop.f32.mrf.mxu0
      %v309 = vadd.f32 %v195, %v308
      %v310 = vpop.f32.mrf.mxu0
      %311 = vdwg.mxu0
      %vm312 = vcmask 785408
      %v313 = vsel %vm312, %v282, 0.0
      %314 = vadd.xlane.f32.xlu0 %v313
      %v315 = vpop.xlane.xlu0 %314
      %v316 = vsel %vm312, %v285, 0.0
      %317 = vadd.xlane.f32.xlu0 %v316
      %v318 = vpop.xlane.xlu0 %317
      %v319 = vsel %vm312, %v290, 0.0
      %320 = vadd.xlane.f32.xlu0 %v319
      %v321 = vpop.xlane.xlu0 %320
      %v322 = vsel %vm312, %v293, 0.0
      %323 = vadd.xlane.f32.xlu0 %v322
      %v324 = vpop.xlane.xlu0 %323
      %v325 = vsel %vm312, %v298, 0.0
      %326 = vadd.xlane.f32.xlu0 %v325
      %v327 = vpop.xlane.xlu0 %326
      %v328 = vsel %vm312, %v301, 0.0
      %329 = vadd.xlane.f32.xlu0 %v328
      %v330 = vpop.xlane.xlu0 %329
      %v331 = vsel %vm312, %v306, 0.0
      %332 = vadd.xlane.f32.xlu0 %v331
      %v333 = vpop.xlane.xlu0 %332
      %v334 = vsel %vm312, %v309, 0.0
      %335 = vadd.xlane.f32.xlu0 %v334
      %v336 = vpop.xlane.xlu0 %335
      %v337 = vrcp.pop 96.0
      %v338 = vmul.f32 %v315, %v337
      %v339 = vmul.f32 %v318, %v337
      %v340 = vmul.f32 %v321, %v337
      %v341 = vmul.f32 %v324, %v337
      %v342 = vmul.f32 %v327, %v337
      %v343 = vmul.f32 %v330, %v337
      %v344 = vmul.f32 %v333, %v337
      %v345 = vmul.f32 %v336, %v337
      %v346 = vmul.f32 %v282, %v282
      %v347 = vmul.f32 %v285, %v285
      %v348 = vmul.f32 %v290, %v290
      %v349 = vmul.f32 %v293, %v293
      %v350 = vmul.f32 %v298, %v298
      %v351 = vmul.f32 %v301, %v301
      %v352 = vmul.f32 %v306, %v306
      %v353 = vmul.f32 %v309, %v309
      %v354 = vsel %vm312, %v346, 0.0
      %355 = vadd.xlane.f32.xlu0 %v354
      %v356 = vpop.xlane.xlu0 %355
      %v357 = vsel %vm312, %v347, 0.0
      %358 = vadd.xlane.f32.xlu0 %v357
      %v359 = vpop.xlane.xlu0 %358
      %v360 = vsel %vm312, %v348, 0.0
      %361 = vadd.xlane.f32.xlu0 %v360
      %v362 = vpop.xlane.xlu0 %361
      %v363 = vsel %vm312, %v349, 0.0
      %364 = vadd.xlane.f32.xlu0 %v363
      %v365 = vpop.xlane.xlu0 %364
      %v366 = vsel %vm312, %v350, 0.0
      %367 = vadd.xlane.f32.xlu0 %v366
      %v368 = vpop.xlane.xlu0 %367
      %v369 = vsel %vm312, %v351, 0.0
      %370 = vadd.xlane.f32.xlu0 %v369
      %v371 = vpop.xlane.xlu0 %370
      %v372 = vsel %vm312, %v352, 0.0
      %373 = vadd.xlane.f32.xlu0 %v372
      %v374 = vpop.xlane.xlu0 %373
      %v375 = vsel %vm312, %v353, 0.0
      %376 = vadd.xlane.f32.xlu0 %v375
      %v377 = vpop.xlane.xlu0 %376
      %v378 = vmul.f32 %v356, %v337
      %v379 = vmul.f32 %v359, %v337
      %v380 = vmul.f32 %v362, %v337
      %v381 = vmul.f32 %v365, %v337
      %v382 = vmul.f32 %v368, %v337
      %v383 = vmul.f32 %v371, %v337
      %v384 = vmul.f32 %v374, %v337
      %v385 = vmul.f32 %v377, %v337
      %v386 = vmul.f32 %v338, %v338
      %v387 = vmul.f32 %v339, %v339
      %v388 = vmul.f32 %v340, %v340
      %v389 = vmul.f32 %v341, %v341
      %v390 = vmul.f32 %v342, %v342
      %v391 = vmul.f32 %v343, %v343
      %v392 = vmul.f32 %v344, %v344
      %v393 = vmul.f32 %v345, %v345
      %v394 = vsub.f32 %v378, %v386
      %v395 = vsub.f32 %v379, %v387
      %v396 = vsub.f32 %v380, %v388
      %v397 = vsub.f32 %v381, %v389
      %v398 = vsub.f32 %v382, %v390
      %v399 = vsub.f32 %v383, %v391
      %v400 = vsub.f32 %v384, %v392
      %v401 = vsub.f32 %v385, %v393
      %v402 = vmax.f32 %v394, 0.0
      %v403 = vmax.f32 %v395, 0.0
      %v404 = vmax.f32 %v396, 0.0
      %v405 = vmax.f32 %v397, 0.0
      %v406 = vmax.f32 %v398, 0.0
      %v407 = vmax.f32 %v399, 0.0
      %v408 = vmax.f32 %v400, 0.0
      %v409 = vmax.f32 %v401, 0.0
      %v410 = vsub.f32 %v282, %v338
      %v411 = vsub.f32 %v285, %v339
      %v412 = vsub.f32 %v290, %v340
      %v413 = vsub.f32 %v293, %v341
      %v414 = vsub.f32 %v298, %v342
      %v415 = vsub.f32 %v301, %v343
      %v416 = vsub.f32 %v306, %v344
      %v417 = vsub.f32 %v309, %v345
      %v418 = vadd.f32 %v402, 1e-05
      %v419 = vadd.f32 %v403, 1e-05
      %v420 = vadd.f32 %v404, 1e-05
      %v421 = vadd.f32 %v405, 1e-05
      %v422 = vadd.f32 %v406, 1e-05
      %v423 = vadd.f32 %v407, 1e-05
      %v424 = vadd.f32 %v408, 1e-05
      %v425 = vadd.f32 %v409, 1e-05
      %v426 = vrsqrt.pop %v418
      %v427 = vrsqrt.pop %v419
      %v428 = vrsqrt.pop %v420
      %v429 = vrsqrt.pop %v421
      %v430 = vrsqrt.pop %v422
      %v431 = vrsqrt.pop %v423
      %v432 = vrsqrt.pop %v424
      %v433 = vrsqrt.pop %v425
      %v434 = vmul.f32 %v410, %v426
      %v435 = vmul.f32 %v411, %v427
      %v436 = vmul.f32 %v412, %v428
      %v437 = vmul.f32 %v413, %v429
      %v438 = vmul.f32 %v414, %v430
      %v439 = vmul.f32 %v415, %v431
      %v440 = vmul.f32 %v416, %v432
      %v441 = vmul.f32 %v417, %v433
      %v442 = vlaneseq
      %v443 = vshrl.u32 %v442, 7
      %v444 = vsub.s32 0, %v443
      %v445 = vrot.slane %v190, %v444
      %v446 = vmul.f32 %v434, %v445
      %v447 = vmul.f32 %v435, %v445
      %v448 = vmul.f32 %v436, %v445
      %v449 = vmul.f32 %v437, %v445
      %v450 = vmul.f32 %v438, %v445
      %v451 = vmul.f32 %v439, %v445
      %v452 = vmul.f32 %v440, %v445
      %v453 = vmul.f32 %v441, %v445
      %v454 = vlaneseq
      %v455 = vshrl.u32 %v454, 7
      %v456 = vsub.s32 0, %v455
      %v457 = vrot.slane %v191, %v456
      %v458 = vadd.f32 %v446, %v457
      %v459 = vadd.f32 %v447, %v457
      %v460 = vadd.f32 %v448, %v457
      %v461 = vadd.f32 %v449, %v457
      %v462 = vadd.f32 %v450, %v457
      %v463 = vadd.f32 %v451, %v457
      %v464 = vadd.f32 %v452, %v457
      %v465 = vadd.f32 %v453, %v457
      %v466 = vpack.c.bf16 %v459, %v458
      %v467 = vpack.c.bf16 %v461, %v460
      %v468 = vpack.c.bf16 %v463, %v462
      %v469 = vpack.c.bf16 %v465, %v464
      %v474 = vunpack.c.l.b16 %v466
      %v475 = vunpack.c.h.b16 %v466
      %v476 = vunpack.c.l.b16 %v467
      %v477 = vunpack.c.h.b16 %v467
      %v478 = vunpack.c.l.b16 %v468
      %v479 = vunpack.c.h.b16 %v468
      %v480 = vunpack.c.l.b16 %v469
      %v481 = vunpack.c.h.b16 %v469
      %v482 = vpack.c.b16 %v474, %v474
      %v483 = vpack.c.b16 %v475, %v475
      %v484 = vpack.c.b16 %v476, %v476
      %v485 = vpack.c.b16 %v477, %v477
      %v486 = vpack.c.b16 %v478, %v478
      %v487 = vpack.c.b16 %v479, %v479
      %v488 = vpack.c.b16 %v480, %v480
      %v489 = vpack.c.b16 %v481, %v481
      %vm498 = vcmask 781312
      %499 = vst.msk [vmem:[%s172] sm:$0xf] %vm498, %v482
      %500 = vst.msk [vmem:[%s172 + $0x4] sm:$0xf] %vm498, %v483
      %501 = vst.msk [vmem:[%s172 + $0x8] sm:$0xf] %vm498, %v484
      %502 = vst.msk [vmem:[%s172 + $0xc] sm:$0xf] %vm498, %v485
      %503 = vst.msk [vmem:[%s172 + $0x10] sm:$0xf] %vm498, %v486
      %504 = vst.msk [vmem:[%s172 + $0x14] sm:$0xf] %vm498, %v487
      %505 = vst.msk [vmem:[%s172 + $0x18] sm:$0xf] %vm498, %v488
      %506 = vst.msk [vmem:[%s172 + $0x1c] sm:$0xf] %vm498, %v489
      %s507 = smul.u32 8, %s14
      %p508 = scmp.lt.s32.totalorder %s507, 15
      %s509 = scalar_select %p508, %s507, 15
      %s510 = smul.addr %s509, 4
      %s511 = scalar_lea.vmem %s3, %s510
      // Predicated region
      $region33: #{tpu_custom_call.1} parent=31 // pred_check
        %p512 = pneg %p100
      $region34: #{tpu_custom_call.1} parent=31 // pred_check_branch
        %514 = sbr.rel (%p512) target = $region36
      $region35: #{tpu_custom_call.1} parent=31 // pred_region
        %s515 = smul.u32 8, %s14
      $region36: #{tpu_custom_call.1} parent=31 // pred_fallthru
        _
    $region32: #{tpu_custom_call.1} parent=5 // pred_fallthru
      _
    %p516 = scmp.le.s32.totalorder 2, %s9
    // Predicated region
    $region37: #{tpu_custom_call.1} parent=5 // pred_check
      %p517 = pneg %p516
    $region38: #{tpu_custom_call.1} parent=5 // pred_check_branch
      %519 = sbr.rel (%p517) target = $region40
    $region39: #{tpu_custom_call.1} parent=5 // pred_region
      %s520 = ssub.s32 %s9, 2
      // Predicated region
      $region41: #{tpu_custom_call.1} parent=39 // pred_check
        %p521 = pneg %p106
      $region42: #{tpu_custom_call.1} parent=39 // pred_check_branch
        %523 = sbr.rel (%p521) target = $region44
      $region43: #{tpu_custom_call.1} parent=39 // pred_region
        %s524 = smul.u32 8, %s15
        %p525 = scmp.lt.s32.totalorder %s524, 15
        %s526 = scalar_select %p525, %s524, 15
        %s527 = smul.addr %s526, 4
        %s528 = scalar_lea.vmem %s3, %s527
      $region44: #{tpu_custom_call.1} parent=39 // pred_fallthru
        _
    $region40: #{tpu_custom_call.1} parent=5 // pred_fallthru
      _
  $region6: #{tpu_custom_call.1} parent=0 // loop_footer
    %s13 = sadd.s32 1, %s9
  $region7: #{tpu_custom_call.1} parent=0 // loop_footer_branch
    %8 = sbr.rel target = $region3
  $region8: #{tpu_custom_call.1} parent=0 // loop_exit
    _

</llo_original>
